<compile_context>
chip_gen: v6e
topology: v6e:2x2x1
jax: 0.10.0
libtpu: 0.0.40
codegen_flags: <defaults>
</compile_context>

<pallas_src>
from functools import partial

import jax
import jax.numpy as jnp
from jax import lax
from jax.experimental import pallas as pl
from jax.experimental.pallas import tpu as pltpu

_GNLL_EPS = 1e-6  # torch F.gaussian_nll_loss default eps (var clamp)


def _round_up(x, m):
    return (x + m - 1) // m * m


def _loss_regression_kernel(lat_ref, w_ref, b_ref, xh_ref, x_ref, mask_ref,
                            out_ref, acc_ref, *, bg_var, half_dim, channels,
                            approx_reciprocal):
    j = pl.program_id(0)
    nj = pl.num_programs(0)

    BC = xh_ref.shape[0]          # batch * channels (sublane-dense rows)
    C = channels
    B = BC // C

    @pl.when(j == 0)
    def _init():
        acc_ref[0] = jnp.float32(0.0)

    # ---- fg variance column, one per (batch, channel) row -------------------
    # lat_ref holds [mu | log_var] repeated C times along rows, so one fused
    # MXU dot gives the fc logits for every flat row; the channel column r % C
    # is then picked with an exact iota select (no reshape, no relayout).
    lat = lat_ref[...].astype(jnp.float32)                       # (BC, 2*Dp)
    logfg = jnp.dot(lat, w_ref[...].astype(jnp.float32),
                    preferred_element_type=jnp.float32)
    logfg = logfg + b_ref[...].astype(jnp.float32)               # (BC, C)
    row_c = lax.broadcasted_iota(jnp.int32, (BC, C), 0) % C
    col_c = lax.broadcasted_iota(jnp.int32, (BC, C), 1)
    fg_col = jnp.sum(jnp.where(col_c == row_c, jnp.exp(logfg), 0.0),
                     axis=-1, keepdims=True)                     # (BC, 1)

    # ---- mask-gated variance + Gaussian NLL on the (BC, blk) tile -----------
    m = mask_ref[...].astype(jnp.float32)                        # (BC, blk)
    bg = jnp.float32(max(float(bg_var), _GNLL_EPS))              # eps clamp fused
    var = jnp.where(m == 0.0, bg,
                    jnp.maximum(m * fg_col, jnp.float32(_GNLL_EPS)))
    diff = xh_ref[...].astype(jnp.float32) - x_ref[...].astype(jnp.float32)
    inv_var = pl.reciprocal(var, approx=approx_reciprocal)       # approx=True -> EUP
    acc_ref[0] += jnp.sum(jnp.log(var) + diff * diff * inv_var)

    # ---- finalize: KL + 0.5/B scaling, write the three scalars --------------
    @pl.when(j == nj - 1)
    def _finalize():
        mu = lat[:, :half_dim]                                   # 128-aligned slices
        lv = lat[:, half_dim:]
        # latent rows are repeated C times -> divide the sum by B*C.
        kl = jnp.float32(0.5 / BC) * jnp.sum(jnp.exp(lv) + mu * mu - 1.0 - lv)
        recon = jnp.float32(0.5 / B) * acc_ref[0]
        out_ref[0] = kl + recon
        out_ref[1] = kl
        out_ref[2] = recon


def make_fused_fc_params(w_mu, w_lv, bias):
    """Fuse (and lane-pad) the fc parameters once at init time.

    Zero pad rows are exact no-ops in the matmul, so semantics are unchanged."""
    D, C = w_mu.shape
    Dp = _round_up(D, 128)
    w = jnp.zeros((2 * Dp, C), dtype=w_mu.dtype)
    w = w.at[:D, :].set(w_mu)
    w = w.at[Dp:Dp + D, :].set(w_lv)
    b = jnp.asarray(bias).reshape(1, C)
    return w, b


def loss_regression(x_hat, x, mu, log_var, mask, w, b, *, bg_var=1.0,
                    approx_reciprocal=False, block_hw=512):
    """Returns (loss, kl_loss, recon_loss) matching LossRegression.forward.

    `w`, `b` must come from make_fused_fc_params (fused + lane-padded fc)."""
    B, C, H, W = x_hat.shape
    HW = H * W
    BC = B * C
    D = mu.shape[1]
    Dp = w.shape[0] // 2
    assert Dp % 128 == 0 and Dp >= D, "use make_fused_fc_params to build w"

    # Latent: zero-pad each half to the 128-aligned width (padded columns add
    # exactly 0 to KL and fc), concatenate, and repeat each batch row C times
    # so the kernel's working set is fully sublane-dense (B*C rows).
    if Dp != D:
        mu = jnp.pad(mu, ((0, 0), (0, Dp - D)))
        log_var = jnp.pad(log_var, ((0, 0), (0, Dp - D)))
    lat_rep = jnp.repeat(jnp.concatenate([mu, log_var], axis=1), C, axis=0)

    # Images: metadata-only reshapes (no stack / copy). Mask: per-channel
    # broadcast (tiny copy; keeps the kernel free of relayouts). bf16 inputs
    # are accepted as-is and only widened in-kernel.
    xh_flat = x_hat.reshape(BC, HW)
    x_flat = x.reshape(BC, HW)
    mask_bc = jnp.broadcast_to(mask.reshape(B, 1, HW), (B, C, HW)).reshape(BC, HW)

    # Lane-dense grid over H*W; blocks are multiples of 128 (full HW otherwise).
    if HW % 128 == 0:
        blk = max(128, min(HW, block_hw))
        while HW % blk:
            blk -= 128
    else:
        blk = HW  # TODO(synk): ragged lane tiles when H*W is not a multiple of 128
    n_blk = HW // blk
    # TODO(synk): per-core partial sums + a "parallel" axis for v7x megacore.

    kernel = partial(_loss_regression_kernel, bg_var=float(bg_var), half_dim=Dp,
                     channels=C, approx_reciprocal=approx_reciprocal)

    grid_spec = pltpu.PrefetchScalarGridSpec(
        num_scalar_prefetch=0,
        grid=(n_blk,),
        in_specs=[
            pl.BlockSpec((BC, 2 * Dp), lambda j: (0, 0)),   # repeated latent (resident)
            pl.BlockSpec((2 * Dp, C), lambda j: (0, 0)),    # fused fc weight (resident)
            pl.BlockSpec((1, C), lambda j: (0, 0)),         # fc bias (resident)
            pl.BlockSpec((BC, blk), lambda j: (0, j)),      # x_hat tile
            pl.BlockSpec((BC, blk), lambda j: (0, j)),      # x tile
            pl.BlockSpec((BC, blk), lambda j: (0, j)),      # per-channel mask tile
        ],
        out_specs=pl.BlockSpec(memory_space=pltpu.MemorySpace.SMEM),
        scratch_shapes=[pltpu.SMEM((1,), jnp.float32)],     # recon partial-sum acc
    )

    bytes_accessed = (lat_rep.size * lat_rep.dtype.itemsize
                      + w.size * w.dtype.itemsize + b.size * b.dtype.itemsize
                      + xh_flat.size * xh_flat.dtype.itemsize
                      + x_flat.size * x_flat.dtype.itemsize
                      + mask_bc.size * mask_bc.dtype.itemsize + 3 * 4)
    cost = pl.CostEstimate(
        flops=2 * BC * (2 * Dp) * C * n_blk + 12 * BC * HW + 5 * BC * 2 * Dp,
        transcendentals=BC * Dp + BC * C * n_blk + BC * HW,
        bytes_accessed=bytes_accessed)

    out = pl.pallas_call(
        kernel,
        out_shape=jax.ShapeDtypeStruct((3,), jnp.float32),
        grid_spec=grid_spec,
        compiler_params=pltpu.CompilerParams(dimension_semantics=("arbitrary",)),
        cost_estimate=cost,
    )(lat_rep, w, b, xh_flat, x_flat, mask_bc)
    return out[0], out[1], out[2]


def _reference(x_hat, x, mu, log_var, mask, w_mu, w_lv, b, *, bg_var=1.0):
    """Pure-JAX transcription of the PyTorch forward, for verification."""
    batch = mu.shape[0]
    kl = jnp.mean(0.5 * jnp.sum(jnp.exp(log_var) + mu ** 2 - 1.0 - log_var, -1))
    latent = jnp.concatenate([mu, log_var], axis=1)
    w = jnp.concatenate([w_mu, w_lv], axis=0)
    fg = jnp.exp(latent @ w + b)                                   # (B, 4)
    m = jnp.broadcast_to(mask, x_hat.shape)                        # repeat(1,4,1,1)
    var = (m == 0).astype(jnp.float32) * bg_var + m * fg[:, :, None, None]
    var = jnp.maximum(var, _GNLL_EPS)
    nll = 0.5 * (jnp.log(var) + (x_hat - x) ** 2 / var)
    recon = jnp.mean(jnp.sum(nll.reshape(batch, -1), axis=1))
    return kl + recon, kl, recon


if __name__ == "__main__":
    B, C, H, W = 2, 4, 16, 16
    latent_dim = 128
    bg_var = 1.0

    key = jax.random.PRNGKey(0)
    k_xh, k_x, k_mu, k_lv, k_mask, k_w, k_b = jax.random.split(key, 7)

    x_hat = jax.random.normal(k_xh, (B, C, H, W), dtype=jnp.float32)
    x = jax.random.normal(k_x, (B, C, H, W), dtype=jnp.float32)
    # Matmul inputs are rounded to bf16-representable values so the comparison
    # is insensitive to the f32-matmul pass count (MXU vs XLA dot defaults).
    mu = (0.5 * jax.random.normal(k_mu, (B, latent_dim), jnp.float32)
          ).astype(jnp.bfloat16).astype(jnp.float32)
    log_var = (0.1 * jax.random.normal(k_lv, (B, latent_dim), jnp.float32)
               ).astype(jnp.bfloat16).astype(jnp.float32)
    mask = (jax.random.uniform(k_mask, (B, 1, H, W)) > 0.5).astype(jnp.float32)

    # nn.Linear(2*latent_dim, 4) deterministic init (uniform +- 1/sqrt(fan_in)),
    # stored transposed as (2*latent_dim, 4) and split in half.
    bound = 1.0 / jnp.sqrt(2.0 * latent_dim)
    w_full = jax.random.uniform(k_w, (2 * latent_dim, 4), jnp.float32,
                                -bound, bound).astype(jnp.bfloat16).astype(jnp.float32)
    w_mu, w_lv = w_full[:latent_dim], w_full[latent_dim:]
    bias = jax.random.uniform(k_b, (1, 4), jnp.float32, -bound, bound)

    # init-time (hoisted) parameter fusion -- done once, outside the step.
    w_fused, b_fused = make_fused_fc_params(w_mu, w_lv, bias)

    fwd = jax.jit(partial(loss_regression, bg_var=bg_var))
    loss, kl, recon = fwd(x_hat, x, mu, log_var, mask, w_fused, b_fused)
    jax.block_until_ready((loss, kl, recon))

    ref_loss, ref_kl, ref_recon = _reference(
        x_hat, x, mu, log_var, mask, w_mu, w_lv, bias, bg_var=bg_var)
    assert jnp.allclose(kl, ref_kl, rtol=2e-4, atol=2e-4), (kl, ref_kl)
    assert jnp.allclose(recon, ref_recon, rtol=2e-4, atol=2e-4), (recon, ref_recon)
    assert jnp.allclose(loss, ref_loss, rtol=2e-4, atol=2e-4), (loss, ref_loss)

    print("KERNEL_OK")
</pallas_src>

<mosaic_0001>
module attributes {stable_mosaic.version = 11 : i64} {
  func.func @_loss_regression_kernel(%arg0: i32, %arg1: memref<8x256xf32, #tpu.memory_space<vmem>>, %arg2: memref<256x4xf32, #tpu.memory_space<vmem>>, %arg3: memref<1x4xf32, #tpu.memory_space<vmem>>, %arg4: memref<8x256xf32, #tpu.memory_space<vmem>>, %arg5: memref<8x256xf32, #tpu.memory_space<vmem>>, %arg6: memref<8x256xf32, #tpu.memory_space<vmem>>, %arg7: memref<3xf32, #tpu.memory_space<smem>>, %arg8: memref<1xf32, #tpu.memory_space<smem>>) attributes {dimension_semantics = [#tpu.dimension_semantics<arbitrary>], iteration_bounds = array<i64: 1>, scalar_prefetch = 0 : i64, scratch_operands = 1 : i64, tpu.core_type = #tpu.core_type<tc>, window_params = [{pipeline_mode = #tpu.pipeline_mode<synchronous>, transform_indices = @transform_0, window_bounds = array<i64: 8, 256>}, {pipeline_mode = #tpu.pipeline_mode<synchronous>, transform_indices = @transform_1, window_bounds = array<i64: 256, 4>}, {pipeline_mode = #tpu.pipeline_mode<synchronous>, transform_indices = @transform_2, window_bounds = array<i64: 1, 4>}, {transform_indices = @transform_3, window_bounds = array<i64: 8, 256>}, {transform_indices = @transform_4, window_bounds = array<i64: 8, 256>}, {transform_indices = @transform_5, window_bounds = array<i64: 8, 256>}, {transform_indices = @transform_6, window_bounds = array<i64: 3>}]} {
    %c0_i32 = arith.constant 0 : i32
    %0 = arith.cmpi eq, %arg0, %c0_i32 : i32
    %1 = arith.extui %0 : i1 to i32
    %c0_i32_0 = arith.constant 0 : i32
    %2 = arith.cmpi ne, %1, %c0_i32_0 : i32
    scf.if %2 {
      %cst_26 = arith.constant 0.000000e+00 : f32
      %c0_27 = arith.constant 0 : index
      %60 = memref.load %arg8[%c0_27] : memref<1xf32, #tpu.memory_space<smem>>
      memref.store %cst_26, %arg8[%c0_27] : memref<1xf32, #tpu.memory_space<smem>>
    } else {
    }
    %c0 = arith.constant 0 : index
    %c0_1 = arith.constant 0 : index
    %3 = vector.load %arg1[%c0, %c0_1] : memref<8x256xf32, #tpu.memory_space<vmem>>, vector<8x256xf32>
    %c0_2 = arith.constant 0 : index
    %c0_3 = arith.constant 0 : index
    %4 = vector.load %arg2[%c0_2, %c0_3] : memref<256x4xf32, #tpu.memory_space<vmem>>, vector<256x4xf32>
    %cst = arith.constant dense<0.000000e+00> : vector<8x4xf32>
    %5 = tpu.matmul %3, %4, %cst {dimension_numbers = #tpu.dot_dimension_numbers<[1], [0], [0], [1], [0, 0, 1, 1], [], []>} : vector<8x256xf32>, vector<256x4xf32>, vector<8x4xf32> -> vector<8x4xf32>
    %c0_4 = arith.constant 0 : index
    %c0_5 = arith.constant 0 : index
    %6 = vector.load %arg3[%c0_4, %c0_5] : memref<1x4xf32, #tpu.memory_space<vmem>>, vector<1x4xf32>
    %7 = vector.broadcast %6 : vector<1x4xf32> to vector<8x4xf32>
    %8 = arith.addf %5, %7 : vector<8x4xf32>
    %9 = tpu.iota {dimensions = array<i32: 0>} : vector<8x4xi32>
    %c4_i32 = arith.constant 4 : i32
    %c0_i32_6 = arith.constant 0 : i32
    %10 = arith.cmpi eq, %c4_i32, %c0_i32_6 : i32
    %c1_i32 = arith.constant 1 : i32
    %11 = arith.select %10, %c1_i32, %c4_i32 : i32
    %12 = vector.broadcast %11 : i32 to vector<8x4xi32>
    %13 = arith.remsi %9, %12 : vector<8x4xi32>
    %c0_i32_7 = arith.constant 0 : i32
    %14 = vector.broadcast %c0_i32_7 : i32 to vector<8x4xi32>
    %15 = arith.cmpi ne, %13, %14 : vector<8x4xi32>
    %c0_i32_8 = arith.constant 0 : i32
    %16 = vector.broadcast %c0_i32_8 : i32 to vector<8x4xi32>
    %17 = arith.cmpi slt, %13, %16 : vector<8x4xi32>
    %c0_i32_9 = arith.constant 0 : i32
    %18 = arith.cmpi slt, %11, %c0_i32_9 : i32
    %19 = vector.broadcast %18 : i1 to vector<8x4xi1>
    %20 = vector.broadcast %19 : vector<8x4xi1> to vector<8x4xi1>
    %21 = arith.xori %17, %20 : vector<8x4xi1>
    %22 = arith.andi %21, %15 : vector<8x4xi1>
    %23 = vector.broadcast %11 : i32 to vector<8x4xi32>
    %24 = arith.addi %13, %23 : vector<8x4xi32>
    %25 = arith.select %22, %24, %13 : vector<8x4xi1>, vector<8x4xi32>
    %26 = tpu.iota {dimensions = array<i32: 1>} : vector<8x4xi32>
    %27 = arith.cmpi eq, %26, %25 : vector<8x4xi32>
    %28 = math.exp %8 : vector<8x4xf32>
    %cst_10 = arith.constant 0.000000e+00 : f32
    %29 = vector.broadcast %cst_10 : f32 to vector<8x4xf32>
    %30 = arith.select %27, %28, %29 : vector<8x4xi1>, vector<8x4xf32>
    %cst_11 = arith.constant dense<0.000000e+00> : vector<8xf32>
    %31 = vector.multi_reduction <add>, %30, %cst_11 [1] : vector<8x4xf32> to vector<8xf32>
    %32 = vector.shape_cast %31 : vector<8xf32> to vector<8x1xf32>
    %c0_12 = arith.constant 0 : index
    %c0_13 = arith.constant 0 : index
    %33 = vector.load %arg6[%c0_12, %c0_13] : memref<8x256xf32, #tpu.memory_space<vmem>>, vector<8x256xf32>
    %cst_14 = arith.constant 0.000000e+00 : f32
    %34 = vector.broadcast %cst_14 : f32 to vector<8x256xf32>
    %35 = arith.cmpf oeq, %33, %34 : vector<8x256xf32>
    %36 = vector.broadcast %32 : vector<8x1xf32> to vector<8x256xf32>
    %37 = arith.mulf %33, %36 : vector<8x256xf32>
    %cst_15 = arith.constant 9.99999997E-7 : f32
    %38 = vector.broadcast %cst_15 : f32 to vector<8x256xf32>
    %39 = arith.maximumf %37, %38 : vector<8x256xf32>
    %cst_16 = arith.constant 1.000000e+00 : f32
    %40 = vector.broadcast %cst_16 : f32 to vector<8x256xf32>
    %41 = arith.select %35, %40, %39 : vector<8x256xi1>, vector<8x256xf32>
    %c0_17 = arith.constant 0 : index
    %c0_18 = arith.constant 0 : index
    %42 = vector.load %arg4[%c0_17, %c0_18] : memref<8x256xf32, #tpu.memory_space<vmem>>, vector<8x256xf32>
    %c0_19 = arith.constant 0 : index
    %c0_20 = arith.constant 0 : index
    %43 = vector.load %arg5[%c0_19, %c0_20] : memref<8x256xf32, #tpu.memory_space<vmem>>, vector<8x256xf32>
    %44 = arith.subf %42, %43 : vector<8x256xf32>
    %45 = tpu.reciprocal %41 : vector<8x256xf32> -> vector<8x256xf32>
    %c0_21 = arith.constant 0 : index
    %46 = memref.load %arg8[%c0_21] : memref<1xf32, #tpu.memory_space<smem>>
    %47 = math.log %41 : vector<8x256xf32>
    %48 = arith.mulf %44, %44 : vector<8x256xf32>
    %49 = arith.mulf %48, %45 : vector<8x256xf32>
    %50 = arith.addf %47, %49 : vector<8x256xf32>
    %51 = vector.shape_cast %50 : vector<8x256xf32> to vector<1x8x256xf32>
    %cst_22 = arith.constant dense<0.000000e+00> : vector<1xf32>
    %52 = vector.multi_reduction <add>, %51, %cst_22 [1, 2] : vector<1x8x256xf32> to vector<1xf32>
    %53 = vector.shape_cast %52 : vector<1xf32> to vector<1x1x1xf32>
    %54 = vector.extract %53[0, 0, 0] : f32 from vector<1x1x1xf32>
    %55 = arith.addf %46, %54 : f32
    %c0_23 = arith.constant 0 : index
    %56 = memref.load %arg8[%c0_23] : memref<1xf32, #tpu.memory_space<smem>>
    memref.store %55, %arg8[%c0_23] : memref<1xf32, #tpu.memory_space<smem>>
    %c0_i32_24 = arith.constant 0 : i32
    %57 = arith.cmpi eq, %arg0, %c0_i32_24 : i32
    %58 = arith.extui %57 : i1 to i32
    %c0_i32_25 = arith.constant 0 : i32
    %59 = arith.cmpi ne, %58, %c0_i32_25 : i32
    scf.if %59 {
      %60 = vector.extract_strided_slice %3 {offsets = [0, 0], sizes = [8, 128], strides = [1, 1]} : vector<8x256xf32> to vector<8x128xf32>
      %61 = vector.extract_strided_slice %3 {offsets = [0, 128], sizes = [8, 128], strides = [1, 1]} : vector<8x256xf32> to vector<8x128xf32>
      %62 = math.exp %61 : vector<8x128xf32>
      %63 = arith.mulf %60, %60 : vector<8x128xf32>
      %64 = arith.addf %62, %63 : vector<8x128xf32>
      %cst_26 = arith.constant 1.000000e+00 : f32
      %65 = vector.broadcast %cst_26 : f32 to vector<8x128xf32>
      %66 = arith.subf %64, %65 : vector<8x128xf32>
      %67 = arith.subf %66, %61 : vector<8x128xf32>
      %68 = vector.shape_cast %67 : vector<8x128xf32> to vector<1x8x128xf32>
      %cst_27 = arith.constant dense<0.000000e+00> : vector<1xf32>
      %69 = vector.multi_reduction <add>, %68, %cst_27 [1, 2] : vector<1x8x128xf32> to vector<1xf32>
      %70 = vector.shape_cast %69 : vector<1xf32> to vector<1x1x1xf32>
      %71 = vector.extract %70[0, 0, 0] : f32 from vector<1x1x1xf32>
      %cst_28 = arith.constant 6.250000e-02 : f32
      %72 = arith.mulf %cst_28, %71 : f32
      %c0_29 = arith.constant 0 : index
      %73 = memref.load %arg8[%c0_29] : memref<1xf32, #tpu.memory_space<smem>>
      %cst_30 = arith.constant 2.500000e-01 : f32
      %74 = arith.mulf %cst_30, %73 : f32
      %75 = arith.addf %72, %74 : f32
      %c0_31 = arith.constant 0 : index
      %76 = memref.load %arg7[%c0_31] : memref<3xf32, #tpu.memory_space<smem>>
      memref.store %75, %arg7[%c0_31] : memref<3xf32, #tpu.memory_space<smem>>
      %c1 = arith.constant 1 : index
      %77 = memref.load %arg7[%c1] : memref<3xf32, #tpu.memory_space<smem>>
      memref.store %72, %arg7[%c1] : memref<3xf32, #tpu.memory_space<smem>>
      %c2 = arith.constant 2 : index
      %78 = memref.load %arg7[%c2] : memref<3xf32, #tpu.memory_space<smem>>
      memref.store %74, %arg7[%c2] : memref<3xf32, #tpu.memory_space<smem>>
    } else {
    }
    return
  }
  func.func @transform_0(%arg0: i32) -> (i32, i32) {
    %c0_i32 = arith.constant 0 : i32
    %c0_i32_0 = arith.constant 0 : i32
    %c0_i32_1 = arith.constant 0 : i32
    return %c0_i32, %c0_i32_0 : i32, i32
  }
  func.func @transform_1(%arg0: i32) -> (i32, i32) {
    %c0_i32 = arith.constant 0 : i32
    %c0_i32_0 = arith.constant 0 : i32
    %c0_i32_1 = arith.constant 0 : i32
    return %c0_i32, %c0_i32_0 : i32, i32
  }
  func.func @transform_2(%arg0: i32) -> (i32, i32) {
    %c0_i32 = arith.constant 0 : i32
    %c0_i32_0 = arith.constant 0 : i32
    %c0_i32_1 = arith.constant 0 : i32
    return %c0_i32, %c0_i32_0 : i32, i32
  }
  func.func @transform_3(%arg0: i32) -> (i32, i32) {
    %c0_i32 = arith.constant 0 : i32
    %c0_i32_0 = arith.constant 0 : i32
    return %c0_i32, %arg0 : i32, i32
  }
  func.func @transform_4(%arg0: i32) -> (i32, i32) {
    %c0_i32 = arith.constant 0 : i32
    %c0_i32_0 = arith.constant 0 : i32
    return %c0_i32, %arg0 : i32, i32
  }
  func.func @transform_5(%arg0: i32) -> (i32, i32) {
    %c0_i32 = arith.constant 0 : i32
    %c0_i32_0 = arith.constant 0 : i32
    return %c0_i32, %arg0 : i32, i32
  }
  func.func @transform_6(%arg0: i32) -> i32 {
    %c0_i32 = arith.constant 0 : i32
    %c0_i32_0 = arith.constant 0 : i32
    return %c0_i32 : i32
  }
}

</mosaic_0001>

<llo_original>
// kernel: loss_regression.1
$region0: #{loss_regression.1}
  #allocation0 [shape = 'u32[]', space=smem, size = 0x4, offset = 0x4, fixed_abs, tag = 'smem constant byte address 0x4 - core index']
  #allocation1 [shape = 'u32[144,128]{1,0:T(1,128)}', space=vmem, size = 0x12000, scoped, tag = 'internal scratch']
  #allocation2 [shape = 'f32[1]{0:T(128)}', space=smem, size = 0x200, scoped, tag = 'scratch operand']
  %s0 = inlined_call_operand.vmem [shape: f32[8,256], index: 0, kind: input, shape index: {}]
  %s1 = inlined_call_operand.vmem [shape: f32[256,4], index: 1, kind: input, shape index: {}]
  %s2 = inlined_call_operand.vmem [shape: f32[1,4], index: 2, kind: input, shape index: {}]
  %s3 = inlined_call_operand.vmem [shape: f32[8,256], index: 3, kind: input, shape index: {}]
  %s4 = inlined_call_operand.vmem [shape: f32[8,256], index: 4, kind: input, shape index: {}]
  %s5 = inlined_call_operand.vmem [shape: f32[8,256], index: 5, kind: input, shape index: {}]
  %s6 = inlined_call_operand.vmem [shape: f32[3], index: 6, kind: output, shape index: {}]
  %s7 = sld [smem:[#allocation0]]
  $region42: #{loss_regression.1} parent=0
    _
  %s9 = ssub.s32 1, %s7
  %s10 = scalar_select 0, %s9, %s7
  $region1: #{loss_regression.1} parent=0
    #allocation3 [shape = 'u8[512]{0}', space=smem, size = 0x200, scoped, tag = 'output window, operand 0, single buffered']
    #allocation4 [shape = 's32[1]{0}', space=sflag, size = 0x4, scoped, tag = 'scoped memory for loss_regression.1']
    %11 = vsyncpa [#allocation4], 0
    // Predicated region
    $region2: #{loss_regression.1} parent=1 // pred_check
      _
    $region3: #{loss_regression.1} parent=1 // pred_check_branch
      %13 = sbr.rel (0) target = $region5
    $region4: #{loss_regression.1} parent=1 // pred_region
      _
    $region5: #{loss_regression.1} parent=1 // pred_fallthru
      _
    // Predicated region
    $region6: #{loss_regression.1} parent=1 // pred_check
      _
    $region7: #{loss_regression.1} parent=1 // pred_check_branch
      %15 = sbr.rel (0) target = $region9
    $region8: #{loss_regression.1} parent=1 // pred_region
      _
    $region9: #{loss_regression.1} parent=1 // pred_fallthru
      _
    // Predicated region
    $region10: #{loss_regression.1} parent=1 // pred_check
      _
    $region11: #{loss_regression.1} parent=1 // pred_check_branch
      %17 = sbr.rel (0) target = $region13
    $region12: #{loss_regression.1} parent=1 // pred_region
      _
    $region13: #{loss_regression.1} parent=1 // pred_fallthru
      _
    // Predicated region
    $region14: #{loss_regression.1} parent=1 // pred_check
      _
    $region15: #{loss_regression.1} parent=1 // pred_check_branch
      %19 = sbr.rel (0) target = $region17
    $region16: #{loss_regression.1} parent=1 // pred_region
      _
    $region17: #{loss_regression.1} parent=1 // pred_fallthru
      _
    // Predicated region
    $region18: #{loss_regression.1} parent=1 // pred_check
      _
    $region19: #{loss_regression.1} parent=1 // pred_check_branch
      %21 = sbr.rel (0) target = $region21
    $region20: #{loss_regression.1} parent=1 // pred_region
      _
    $region21: #{loss_regression.1} parent=1 // pred_fallthru
      _
    // Predicated region
    $region22: #{loss_regression.1} parent=1 // pred_check
      _
    $region23: #{loss_regression.1} parent=1 // pred_check_branch
      %23 = sbr.rel (0) target = $region25
    $region24: #{loss_regression.1} parent=1 // pred_region
      _
    $region25: #{loss_regression.1} parent=1 // pred_fallthru
      _
    %p24 = scmp.eq.s32.totalorder 0, 0
    // Predicated region
    $region26: #{loss_regression.1} parent=1 // pred_check
      %p25 = pneg %p24
    $region27: #{loss_regression.1} parent=1 // pred_check_branch
      %27 = sbr.rel (%p25) target = $region29
    $region28: #{loss_regression.1} parent=1 // pred_region
      %s28 = scalar_lea.smem [#allocation2], 0
      %29 = sst [smem:[%s28]] 0.0
    $region29: #{loss_regression.1} parent=1 // pred_fallthru
      _
    %v30 = vld [vmem:[%s0] sm:$0xff]
    %v31 = vld [vmem:[%s0 + $0x8] sm:$0xff]
    %v32 = vld [vmem:[%s1] sm:$0xff]
    %v33 = vld [vmem:[%s1 + $0x8] sm:$0xff]
    %v34 = vld [vmem:[%s1 + $0x10] sm:$0xff]
    %v35 = vld [vmem:[%s1 + $0x18] sm:$0xff]
    %v36 = vld [vmem:[%s1 + $0x20] sm:$0xff]
    %v37 = vld [vmem:[%s1 + $0x28] sm:$0xff]
    %v38 = vld [vmem:[%s1 + $0x30] sm:$0xff]
    %v39 = vld [vmem:[%s1 + $0x38] sm:$0xff]
    %v40 = vld [vmem:[%s1 + $0x40] sm:$0xff]
    %v41 = vld [vmem:[%s1 + $0x48] sm:$0xff]
    %v42 = vld [vmem:[%s1 + $0x50] sm:$0xff]
    %v43 = vld [vmem:[%s1 + $0x58] sm:$0xff]
    %v44 = vld [vmem:[%s1 + $0x60] sm:$0xff]
    %v45 = vld [vmem:[%s1 + $0x68] sm:$0xff]
    %v46 = vld [vmem:[%s1 + $0x70] sm:$0xff]
    %v47 = vld [vmem:[%s1 + $0x78] sm:$0xff]
    %v48 = vld [vmem:[%s1 + $0x80] sm:$0xff]
    %v49 = vld [vmem:[%s1 + $0x88] sm:$0xff]
    %v50 = vld [vmem:[%s1 + $0x90] sm:$0xff]
    %v51 = vld [vmem:[%s1 + $0x98] sm:$0xff]
    %v52 = vld [vmem:[%s1 + $0xa0] sm:$0xff]
    %v53 = vld [vmem:[%s1 + $0xa8] sm:$0xff]
    %v54 = vld [vmem:[%s1 + $0xb0] sm:$0xff]
    %v55 = vld [vmem:[%s1 + $0xb8] sm:$0xff]
    %v56 = vld [vmem:[%s1 + $0xc0] sm:$0xff]
    %v57 = vld [vmem:[%s1 + $0xc8] sm:$0xff]
    %v58 = vld [vmem:[%s1 + $0xd0] sm:$0xff]
    %v59 = vld [vmem:[%s1 + $0xd8] sm:$0xff]
    %v60 = vld [vmem:[%s1 + $0xe0] sm:$0xff]
    %v61 = vld [vmem:[%s1 + $0xe8] sm:$0xff]
    %v62 = vld [vmem:[%s1 + $0xf0] sm:$0xff]
    %v63 = vld [vmem:[%s1 + $0xf8] sm:$0xff]
    %v64 = vld [vmem:[%s2] sm:$0x1]
    %v66 = vlaneseq
    %v67 = vshrl.u32 %v66, 7
    %v68 = vsub.s32 0, %v67
    %v69 = vrot.slane %v64, %v68
    %71 = vmatprep.subr.mxu0 0.0
    %72 = vmatpush1.msra.mxu0 %v47
    %73 = vmatprep.subr.mxu0 0.0
    %74 = vmatpush1.msra.mxu0 %v46
    %75 = vmatprep.subr.mxu0 0.0
    %76 = vmatpush1.msra.mxu0 %v45
    %77 = vmatprep.subr.mxu0 0.0
    %78 = vmatpush1.msra.mxu0 %v44
    %79 = vmatprep.subr.mxu0 0.0
    %80 = vmatpush1.msra.mxu0 %v43
    %81 = vmatprep.subr.mxu0 0.0
    %82 = vmatpush1.msra.mxu0 %v42
    %83 = vmatprep.subr.mxu0 0.0
    %84 = vmatpush1.msra.mxu0 %v41
    %85 = vmatprep.subr.mxu0 0.0
    %86 = vmatpush1.msra.mxu0 %v40
    %87 = vmatprep.subr.mxu0 0.0
    %88 = vmatpush1.msra.mxu0 %v39
    %89 = vmatprep.subr.mxu0 0.0
    %90 = vmatpush1.msra.mxu0 %v38
    %91 = vmatprep.subr.mxu0 0.0
    %92 = vmatpush1.msra.mxu0 %v37
    %93 = vmatprep.subr.mxu0 0.0
    %94 = vmatpush1.msra.mxu0 %v36
    %95 = vmatprep.subr.mxu0 0.0
    %96 = vmatpush1.msra.mxu0 %v35
    %97 = vmatprep.subr.mxu0 0.0
    %98 = vmatpush1.msra.mxu0 %v34
    %99 = vmatprep.subr.mxu0 0.0
    %100 = vmatpush1.msra.mxu0 %v33
    %101 = vmatprep.subr.mxu0 0.0
    %102 = vmatpush1.msra.mxu0 %v32
    %103 = vmatprep.subr.mxu0 0.0
    %104 = vmatpush2.msra.mxu0 %v63
    %105 = vmatprep.subr.mxu0 0.0
    %106 = vmatpush2.msra.mxu0 %v62
    %107 = vmatprep.subr.mxu0 0.0
    %108 = vmatpush2.msra.mxu0 %v61
    %109 = vmatprep.subr.mxu0 0.0
    %110 = vmatpush2.msra.mxu0 %v60
    %111 = vmatprep.subr.mxu0 0.0
    %112 = vmatpush2.msra.mxu0 %v59
    %113 = vmatprep.subr.mxu0 0.0
    %114 = vmatpush2.msra.mxu0 %v58
    %115 = vmatprep.subr.mxu0 0.0
    %116 = vmatpush2.msra.mxu0 %v57
    %117 = vmatprep.subr.mxu0 0.0
    %118 = vmatpush2.msra.mxu0 %v56
    %119 = vmatprep.subr.mxu0 0.0
    %120 = vmatpush2.msra.mxu0 %v55
    %121 = vmatprep.subr.mxu0 0.0
    %122 = vmatpush2.msra.mxu0 %v54
    %123 = vmatprep.subr.mxu0 0.0
    %124 = vmatpush2.msra.mxu0 %v53
    %125 = vmatprep.subr.mxu0 0.0
    %126 = vmatpush2.msra.mxu0 %v52
    %127 = vmatprep.subr.mxu0 0.0
    %128 = vmatpush2.msra.mxu0 %v51
    %129 = vmatprep.subr.mxu0 0.0
    %130 = vmatpush2.msra.mxu0 %v50
    %131 = vmatprep.subr.mxu0 0.0
    %132 = vmatpush2.msra.mxu0 %v49
    %133 = vmatprep.subr.mxu0 0.0
    %134 = vmatpush2.msra.mxu0 %v48
    %135 = vmatprep.mubr.f32.mxu0 %v31
    %136 = vmatmul.mubr.f32.gmra.mxu0 %v30
    %v137 = vpop.f32.mrf.mxu0
    %v138 = vadd.f32 %v69, %v137
    %v139 = vpop.f32.mrf.mxu0
    %140 = vdwg.mxu0
    %v141 = vlaneseq
    %v142 = vshrl.u32 %v141, 7
    %vm143 = vcmp.lt.s32.totalorder %v142, 0
    %v144 = vsub.s32 0, %v142
    %v145 = vsel %vm143, %v144, %v142
    %v146 = vshrl.u32 %v145, 2
    %v147 = vand.u32 %v145, 3
    %v148 = vsub.s32 0, %v147
    %v149 = vsel %vm143, %v148, %v147
    %vm150 = vcmp.ne.s32.totalorder %v149, 0
    %vm151 = vcmp.lt.s32.totalorder %v149, 0
    %vm152 = vmand %vm151, %vm150
    %v153 = vadd.s32 %v149, 4
    %v154 = vsel %vm152, %v153, %v149
    %v155 = vlaneseq
    %v156 = vand.u32 %v155, 127
    %vm157 = vcmp.eq.s32.totalorder %v156, %v154
    %v158 = vmul.f32 %v138, 1.442695
    %v159 = vpow.pop %v158
    %v160 = vsel %vm157, %v159, 0.0
    %vm161 = vcmask 31744
    %v162 = vsel %vm161, %v160, 0.0
    %163 = vadd.xlane.f32.xlu0 %v162
    %v164 = vpop.xlane.xlu0 %163
    %v165 = vld [vmem:[%s5] sm:$0xff]
    %v166 = vld [vmem:[%s5 + $0x8] sm:$0xff]
    %vm167 = vcmp.eq.f32.partialorder %v165, 0.0
    %vm168 = vcmp.eq.f32.partialorder %v166, 0.0
    %v169 = vmul.f32 %v165, %v164
    %v170 = vmul.f32 %v166, %v164
    %v171 = vmax.f32 %v169, 1e-06
    %v172 = vmax.f32 %v170, 1e-06
    %v173 = vsel %vm167, 1.0, %v171
    %v174 = vsel %vm168, 1.0, %v172
    %v175 = vld [vmem:[%s3] sm:$0xff]
    %v176 = vld [vmem:[%s3 + $0x8] sm:$0xff]
    %v177 = vld [vmem:[%s4] sm:$0xff]
    %v178 = vld [vmem:[%s4 + $0x8] sm:$0xff]
    %v179 = vsub.f32 %v175, %v177
    %v180 = vsub.f32 %v176, %v178
    %v181 = vrcp.pop %v173
    %v182 = vrcp.pop %v174
    %s183 = sld [smem:[#allocation2]]
    %v184 = vlog2.pop %v173
    %v185 = vmul.f32 %v184, 0.6931472
    %v186 = vlog2.pop %v174
    %v187 = vmul.f32 %v186, 0.6931472
    %v188 = vmul.f32 %v179, %v179
    %v189 = vmul.f32 %v180, %v180
    %v190 = vmul.f32 %v188, %v181
    %v191 = vmul.f32 %v189, %v182
    %v192 = vadd.f32 %v185, %v190
    %v193 = vadd.f32 %v187, %v191
    %v194 = vadd.f32 %v192, %v193
    %195 = vadd.xlane.f32.xlu0 %v194
    %v196 = vpop.xlane.xlu0 %195
    %v197 = vrot.slane %v196, 4
    %v198 = vadd.f32 %v196, %v197
    %v199 = vrot.slane %v198, 2
    %v200 = vadd.f32 %v198, %v199
    %v201 = vrot.slane %v200, 1
    %v202 = vadd.f32 %v200, %v201
    %s203 = vtos %v202
    %s204 = sadd.f32 %s183, %s203
    %s205 = scalar_lea.smem [#allocation2], 0
    %206 = sst [smem:[%s205]] %s204
    // Predicated region
    $region30: #{loss_regression.1} parent=1 // pred_check
      %p207 = pneg %p24
    $region31: #{loss_regression.1} parent=1 // pred_check_branch
      %209 = sbr.rel (%p207) target = $region33
    $region32: #{loss_regression.1} parent=1 // pred_region
      %v210 = vmul.f32 %v31, 1.442695
      %v211 = vpow.pop %v210
      %v212 = vmul.f32 %v30, %v30
      %v213 = vadd.f32 %v211, %v212
      %v214 = vsub.f32 %v213, 1.0
      %v215 = vsub.f32 %v214, %v31
      %216 = vadd.xlane.f32.xlu0 %v215
      %v217 = vpop.xlane.xlu0 %216
      %v218 = vrot.slane %v217, 4
      %v219 = vadd.f32 %v217, %v218
      %v220 = vrot.slane %v219, 2
      %v221 = vadd.f32 %v219, %v220
      %v222 = vrot.slane %v221, 1
      %v223 = vadd.f32 %v221, %v222
      %s224 = vtos %v223
      %s225 = smul.f32 %s224, 0.0625
      %s226 = sld [smem:[#allocation2]]
      %s227 = smul.f32 %s226, 0.25
      %s228 = sadd.f32 %s225, %s227
      %s229 = scalar_lea.smem [#allocation3], 0
      %230 = sst [smem:[%s229]] %s228
      %s231 = scalar_lea.smem [#allocation3], 1
      %232 = sst [smem:[%s231]] %s225
      %s233 = scalar_lea.smem [#allocation3], 2
      %234 = sst [smem:[%s233]] %s227
    $region33: #{loss_regression.1} parent=1 // pred_fallthru
      _
    // Predicated region
    $region34: #{loss_regression.1} parent=1 // pred_check
      _
    $region35: #{loss_regression.1} parent=1 // pred_check_branch
      %236 = sbr.rel (0) target = $region37
    $region36: #{loss_regression.1} parent=1 // pred_region
      %s238 = ssub.s32 16, 16
      %239 = vsyncadd [#allocation4], %s238
      %s241 = sshll.u32 %s6, 4
      %s242 = int_to_ptr.vmem [resolvable:$true] %s241
      %244 = dma.smem_to_vmem [#allocation3], 16, %s242, [#allocation4]
    $region37: #{loss_regression.1} parent=1 // pred_fallthru
      _
    // Predicated region
    $region38: #{loss_regression.1} parent=1 // pred_check
      _
    $region39: #{loss_regression.1} parent=1 // pred_check_branch
      %246 = sbr.rel (0) target = $region41
    $region40: #{loss_regression.1} parent=1 // pred_region
      %247 = dma.done [#allocation4], 16
    $region41: #{loss_regression.1} parent=1 // pred_fallthru
      _
    %248 = sfence
    %249 = vsyncpa [#allocation4], 1

</llo_original>
